<compile_context>
chip_gen: v5e
topology: v5e:2x2
jax: 0.10.0
libtpu: 0.0.40
codegen_flags: <defaults>
</compile_context>

<pallas_src>
import functools
import math

import jax
import jax.numpy as jnp
from jax import lax
from jax.experimental import pallas as pl
from jax.experimental.pallas import tpu as pltpu

# Large finite negative used for masking; avoids exp(-inf - -inf) = NaN for
# fully-masked rows inside the online-softmax update.
_NEG_INF = -1e30


def _attend(q_ref, k_ref, v_ref, bias_ref, ctx_ref, attn_ref,
            m_scr, l_scr, acc_scr, *, scale, tk, dot_dtype):
    """One (q_tile, k_tile) step of flash-style attention with exact attn output.

    ctx/attn output blocks are resident in VMEM across the k axis (their
    index_map ignores ki), so they double as accumulators.
    """
    ki = pl.program_id(2)
    nk = pl.num_programs(2)

    @pl.when(ki == 0)
    def _init():
        m_scr[...] = jnp.full_like(m_scr, _NEG_INF)
        l_scr[...] = jnp.zeros_like(l_scr)
        acc_scr[...] = jnp.zeros_like(acc_scr)

    dd = q_ref.dtype if dot_dtype is None else dot_dtype

    # Fold 1/sqrt(d) into the (tq, d) query tile: O(tq*d) instead of O(tq*tk).
    q = (q_ref[...] * scale).astype(dd)            # (tq, d)
    k = k_ref[...].astype(dd)                      # (tk, d)
    v = v_ref[...]                                 # (tk, d)

    # QK^T: contract d on both operands directly -> no XLU transpose of k.
    s = lax.dot_general(q, k, (((1,), (1,)), ((), ())),
                        preferred_element_type=jnp.float32)   # (tq, tk) f32

    if bias_ref is not None:
        # Additive bf16 bias (0 or -1e30): one VPU add, no compare+select.
        s = s + bias_ref[...].astype(jnp.float32)

    # Online softmax update.
    m_prev = m_scr[...]                                          # (tq, 1)
    m_new = jnp.maximum(m_prev, jnp.max(s, axis=-1, keepdims=True))
    alpha = jnp.exp(m_prev - m_new)                              # (tq, 1)
    p = jnp.exp(s - m_new)                                       # (tq, tk)

    l_scr[...] = alpha * l_scr[...] + jnp.sum(p, axis=-1, keepdims=True)
    acc_scr[...] = alpha * acc_scr[...] + jnp.dot(
        p.astype(dd), v.astype(dd), preferred_element_type=jnp.float32)
    m_scr[...] = m_new

    # The attn row (tq, k_len) stays resident in VMEM across the k loop:
    # rescale previously written tiles onto the new running max, then store
    # the current (still unnormalized) tile into its 128-aligned column slot.
    if attn_ref.shape[-1] == tk:
        # Single k tile: whole row in one lane-dense store.
        attn_ref[...] = p.astype(attn_ref.dtype)
    else:
        @pl.when(ki > 0)
        def _rescale():
            attn_ref[...] = (attn_ref[...].astype(jnp.float32) * alpha
                             ).astype(attn_ref.dtype)

        col = pl.multiple_of(ki * tk, tk)
        attn_ref[:, pl.ds(col, tk)] = p.astype(attn_ref.dtype)

    @pl.when(ki == nk - 1)
    def _finalize():
        inv_l = pl.reciprocal(l_scr[...], approx=True)           # EUP slot
        attn_ref[...] = (attn_ref[...].astype(jnp.float32) * inv_l
                         ).astype(attn_ref.dtype)
        ctx_ref[...] = (acc_scr[...] * inv_l).astype(ctx_ref.dtype)


def _sdpa_kernel(q_ref, k_ref, v_ref, ctx_ref, attn_ref,
                 m_scr, l_scr, acc_scr, *, scale, tk, dot_dtype):
    _attend(q_ref, k_ref, v_ref, None, ctx_ref, attn_ref,
            m_scr, l_scr, acc_scr, scale=scale, tk=tk, dot_dtype=dot_dtype)


def _sdpa_bias_kernel(q_ref, k_ref, v_ref, bias_ref, ctx_ref, attn_ref,
                      m_scr, l_scr, acc_scr, *, scale, tk, dot_dtype):
    _attend(q_ref, k_ref, v_ref, bias_ref, ctx_ref, attn_ref,
            m_scr, l_scr, acc_scr, scale=scale, tk=tk, dot_dtype=dot_dtype)


def _pick_tile(dim, cap):
    """Largest multiple-of-128 divisor of `dim` that is <= cap, else full dim."""
    if dim % 128 == 0:
        t = min(cap, dim)
        t -= t % 128
        t = max(t, 128)
        while dim % t != 0:
            t -= 128
        return t
    return dim  # full-array block (always legal)


def scaled_dot_product_attention(query, key, value, mask=None, *,
                                 tq_cap=256, tk_cap=512, mxu_dtype=None):
    """Pallas TPU implementation of ScaledDotProductAttention.forward.

    query: (B, q_len, d); key/value: (B, k_len, d)
    mask:  optional, reshapeable to (B, q_len, k_len); nonzero entries masked.
    Returns (context, attn).
    """
    B, q_len, d = query.shape
    _, k_len, _ = key.shape
    scale = 1.0 / math.sqrt(d)

    tq = _pick_tile(q_len, tq_cap)
    tk = _pick_tile(k_len, tk_cap)
    grid = (B, q_len // tq, k_len // tk)

    out_shape = (
        jax.ShapeDtypeStruct((B, q_len, d), query.dtype),      # context
        jax.ShapeDtypeStruct((B, q_len, k_len), query.dtype),  # attn
    )
    in_specs = [
        pl.BlockSpec((None, tq, d), lambda b, qi, ki: (b, qi, 0)),  # q (resident over k)
        pl.BlockSpec((None, tk, d), lambda b, qi, ki: (b, ki, 0)),  # k
        pl.BlockSpec((None, tk, d), lambda b, qi, ki: (b, ki, 0)),  # v
    ]
    out_specs = [
        pl.BlockSpec((None, tq, d), lambda b, qi, ki: (b, qi, 0)),      # ctx (resident over k)
        pl.BlockSpec((None, tq, k_len), lambda b, qi, ki: (b, qi, 0)),  # attn row (resident over k)
    ]
    scratch_shapes = [
        pltpu.VMEM((tq, 1), jnp.float32),   # running max
        pltpu.VMEM((tq, 1), jnp.float32),   # running denominator
        pltpu.VMEM((tq, d), jnp.float32),   # f32 context accumulator
    ]
    compiler_params = pltpu.CompilerParams(
        dimension_semantics=("parallel", "parallel", "arbitrary"),
        vmem_limit_bytes=48 * 1024 * 1024,
    )

    args = [query, key, value]
    if mask is None:
        kernel = functools.partial(_sdpa_kernel, scale=scale, tk=tk,
                                   dot_dtype=mxu_dtype)
    else:
        # Mirror torch's mask.view(score.size()), then ship an additive bf16
        # bias (0 / -1e30) instead of an i32 mask.
        mask_arr = jnp.reshape(jnp.asarray(mask), (B, q_len, k_len))
        bias = jnp.where(mask_arr != 0, jnp.float32(_NEG_INF),
                         jnp.float32(0.0)).astype(jnp.bfloat16)
        in_specs.append(pl.BlockSpec((None, tq, tk),
                                     lambda b, qi, ki: (b, qi, ki)))
        args.append(bias)
        kernel = functools.partial(_sdpa_bias_kernel, scale=scale, tk=tk,
                                   dot_dtype=mxu_dtype)

    return pl.pallas_call(
        kernel,
        out_shape=out_shape,
        grid_spec=pltpu.PrefetchScalarGridSpec(
            num_scalar_prefetch=0,
            grid=grid,
            in_specs=in_specs,
            out_specs=out_specs,
            scratch_shapes=scratch_shapes,
        ),
        compiler_params=compiler_params,
    )(*args)


def _reference(query, key, value, mask=None):
    d = query.shape[-1]
    score = jnp.einsum("bqd,bkd->bqk", query, key) / jnp.sqrt(jnp.float32(d))
    if mask is not None:
        score = jnp.where(jnp.reshape(mask, score.shape) != 0, -jnp.inf, score)
    attn = jax.nn.softmax(score, axis=-1)
    context = jnp.einsum("bqk,bkd->bqd", attn, value)
    return context, attn


def _check(name, query, key, value, mask=None, **kw):
    ctx, attn = scaled_dot_product_attention(query, key, value, mask, **kw)
    jax.block_until_ready(ctx)
    jax.block_until_ready(attn)
    ref_ctx, ref_attn = _reference(query, key, value, mask)
    assert jnp.allclose(ctx, ref_ctx, atol=2e-3, rtol=2e-3), f"{name}: context mismatch"
    assert jnp.allclose(attn, ref_attn, atol=2e-3, rtol=2e-3), f"{name}: attn mismatch"


if __name__ == "__main__":
    # 1) Tiny shapes from the module docstring (single-block degenerate path).
    B, L, D = 2, 8, 32
    kq, kk, kv = jax.random.split(jax.random.PRNGKey(0), 3)
    q = jax.random.normal(kq, (B, L, D), jnp.float32)
    k = jax.random.normal(kk, (B, L, D), jnp.float32)
    v = jax.random.normal(kv, (B, L, D), jnp.float32)
    _check("tiny", q, k, v)
    causal = jnp.broadcast_to(jnp.triu(jnp.ones((L, L), jnp.bool_), k=1), (B, L, L))
    _check("tiny+mask", q, k, v, causal)

    # 2) MXU/lane-aligned shapes exercising the (B, q_tiles, k_tiles) grid and
    #    the online softmax across multiple k tiles.
    B, L, D = 2, 512, 128
    kq, kk, kv = jax.random.split(jax.random.PRNGKey(1), 3)
    q = jax.random.normal(kq, (B, L, D), jnp.float32)
    k = jax.random.normal(kk, (B, L, D), jnp.float32)
    v = jax.random.normal(kv, (B, L, D), jnp.float32)
    _check("tiled", q, k, v, tq_cap=128, tk_cap=128)
    causal = jnp.broadcast_to(jnp.triu(jnp.ones((L, L), jnp.bool_), k=1), (B, L, L))
    _check("tiled+mask", q, k, v, causal, tq_cap=128, tk_cap=128)

    print("KERNEL_OK")
</pallas_src>

<mosaic_0001>
module attributes {stable_mosaic.version = 11 : i64} {
  func.func @_sdpa_kernel(%arg0: i32, %arg1: i32, %arg2: i32, %arg3: memref<1x8x32xf32, #tpu.memory_space<vmem>>, %arg4: memref<1x8x32xf32, #tpu.memory_space<vmem>>, %arg5: memref<1x8x32xf32, #tpu.memory_space<vmem>>, %arg6: memref<1x8x32xf32, #tpu.memory_space<vmem>>, %arg7: memref<1x8x8xf32, #tpu.memory_space<vmem>>, %arg8: memref<8x1xf32, #tpu.memory_space<vmem>>, %arg9: memref<8x1xf32, #tpu.memory_space<vmem>>, %arg10: memref<8x32xf32, #tpu.memory_space<vmem>>) attributes {dimension_semantics = [#tpu.dimension_semantics<parallel>, #tpu.dimension_semantics<parallel>, #tpu.dimension_semantics<arbitrary>], iteration_bounds = array<i64: 2, 1, 1>, scalar_prefetch = 0 : i64, scratch_operands = 3 : i64, tpu.core_type = #tpu.core_type<tc>, window_params = [{transform_indices = @transform_0, window_bounds = array<i64: 1, 8, 32>}, {transform_indices = @transform_1, window_bounds = array<i64: 1, 8, 32>}, {transform_indices = @transform_2, window_bounds = array<i64: 1, 8, 32>}, {transform_indices = @transform_3, window_bounds = array<i64: 1, 8, 32>}, {transform_indices = @transform_4, window_bounds = array<i64: 1, 8, 8>}]} {
    %c0_i32 = arith.constant 0 : i32
    %0 = arith.cmpi eq, %arg2, %c0_i32 : i32
    %1 = arith.extui %0 : i1 to i32
    %c0_i32_0 = arith.constant 0 : i32
    %2 = arith.cmpi ne, %1, %c0_i32_0 : i32
    scf.if %2 {
      %cst_30 = arith.constant -1.000000e+30 : f32
      %40 = vector.broadcast %cst_30 : f32 to vector<8x1xf32>
      %c0_31 = arith.constant 0 : index
      %c0_32 = arith.constant 0 : index
      %41 = vector.load %arg8[%c0_31, %c0_32] : memref<8x1xf32, #tpu.memory_space<vmem>>, vector<8x1xf32>
      tpu.vector_store %arg8[%c0_31, %c0_32], %40 {strides = array<i32>} : memref<8x1xf32, #tpu.memory_space<vmem>>, vector<8x1xf32>,
      %cst_33 = arith.constant 0.000000e+00 : f32
      %42 = vector.broadcast %cst_33 : f32 to vector<8x1xf32>
      %c0_34 = arith.constant 0 : index
      %c0_35 = arith.constant 0 : index
      %43 = vector.load %arg9[%c0_34, %c0_35] : memref<8x1xf32, #tpu.memory_space<vmem>>, vector<8x1xf32>
      tpu.vector_store %arg9[%c0_34, %c0_35], %42 {strides = array<i32>} : memref<8x1xf32, #tpu.memory_space<vmem>>, vector<8x1xf32>,
      %cst_36 = arith.constant 0.000000e+00 : f32
      %44 = vector.broadcast %cst_36 : f32 to vector<8x32xf32>
      %c0_37 = arith.constant 0 : index
      %c0_38 = arith.constant 0 : index
      %45 = vector.load %arg10[%c0_37, %c0_38] : memref<8x32xf32, #tpu.memory_space<vmem>>, vector<8x32xf32>
      tpu.vector_store %arg10[%c0_37, %c0_38], %44 {strides = array<i32>} : memref<8x32xf32, #tpu.memory_space<vmem>>, vector<8x32xf32>,
    } else {
    }
    %c0 = arith.constant 0 : index
    %c0_1 = arith.constant 0 : index
    %c0_2 = arith.constant 0 : index
    %3 = vector.load %arg3[%c0, %c0_1, %c0_2] : memref<1x8x32xf32, #tpu.memory_space<vmem>>, vector<1x8x32xf32>
    %4 = vector.shape_cast %3 : vector<1x8x32xf32> to vector<8x32xf32>
    %cst = arith.constant 0.176776692 : f32
    %5 = vector.broadcast %cst : f32 to vector<8x32xf32>
    %6 = arith.mulf %4, %5 : vector<8x32xf32>
    %c0_3 = arith.constant 0 : index
    %c0_4 = arith.constant 0 : index
    %c0_5 = arith.constant 0 : index
    %7 = vector.load %arg4[%c0_3, %c0_4, %c0_5] : memref<1x8x32xf32, #tpu.memory_space<vmem>>, vector<1x8x32xf32>
    %8 = vector.shape_cast %7 : vector<1x8x32xf32> to vector<8x32xf32>
    %c0_6 = arith.constant 0 : index
    %c0_7 = arith.constant 0 : index
    %c0_8 = arith.constant 0 : index
    %9 = vector.load %arg5[%c0_6, %c0_7, %c0_8] : memref<1x8x32xf32, #tpu.memory_space<vmem>>, vector<1x8x32xf32>
    %10 = vector.shape_cast %9 : vector<1x8x32xf32> to vector<8x32xf32>
    %cst_9 = arith.constant dense<0.000000e+00> : vector<8x8xf32>
    %11 = tpu.matmul %6, %8, %cst_9 {dimension_numbers = #tpu.dot_dimension_numbers<[1], [1], [0], [0], [0, 0, 1, 0], [], []>} : vector<8x32xf32>, vector<8x32xf32>, vector<8x8xf32> -> vector<8x8xf32>
    %c0_10 = arith.constant 0 : index
    %c0_11 = arith.constant 0 : index
    %12 = vector.load %arg8[%c0_10, %c0_11] : memref<8x1xf32, #tpu.memory_space<vmem>>, vector<8x1xf32>
    %cst_12 = arith.constant dense<0xFF800000> : vector<8xf32>
    %13 = vector.multi_reduction <maximumf>, %11, %cst_12 [1] : vector<8x8xf32> to vector<8xf32>
    %14 = vector.shape_cast %13 : vector<8xf32> to vector<8x1xf32>
    %15 = arith.maximumf %12, %14 : vector<8x1xf32>
    %16 = arith.subf %12, %15 : vector<8x1xf32>
    %17 = math.exp %16 : vector<8x1xf32>
    %18 = vector.broadcast %15 : vector<8x1xf32> to vector<8x8xf32>
    %19 = arith.subf %11, %18 : vector<8x8xf32>
    %20 = math.exp %19 : vector<8x8xf32>
    %c0_13 = arith.constant 0 : index
    %c0_14 = arith.constant 0 : index
    %21 = vector.load %arg9[%c0_13, %c0_14] : memref<8x1xf32, #tpu.memory_space<vmem>>, vector<8x1xf32>
    %22 = arith.mulf %17, %21 : vector<8x1xf32>
    %cst_15 = arith.constant dense<0.000000e+00> : vector<8xf32>
    %23 = vector.multi_reduction <add>, %20, %cst_15 [1] : vector<8x8xf32> to vector<8xf32>
    %24 = vector.shape_cast %23 : vector<8xf32> to vector<8x1xf32>
    %25 = arith.addf %22, %24 : vector<8x1xf32>
    %c0_16 = arith.constant 0 : index
    %c0_17 = arith.constant 0 : index
    %26 = vector.load %arg9[%c0_16, %c0_17] : memref<8x1xf32, #tpu.memory_space<vmem>>, vector<8x1xf32>
    tpu.vector_store %arg9[%c0_16, %c0_17], %25 {strides = array<i32>} : memref<8x1xf32, #tpu.memory_space<vmem>>, vector<8x1xf32>,
    %c0_18 = arith.constant 0 : index
    %c0_19 = arith.constant 0 : index
    %27 = vector.load %arg10[%c0_18, %c0_19] : memref<8x32xf32, #tpu.memory_space<vmem>>, vector<8x32xf32>
    %28 = vector.broadcast %17 : vector<8x1xf32> to vector<8x32xf32>
    %29 = arith.mulf %28, %27 : vector<8x32xf32>
    %cst_20 = arith.constant dense<0.000000e+00> : vector<8x32xf32>
    %30 = tpu.matmul %20, %10, %cst_20 {dimension_numbers = #tpu.dot_dimension_numbers<[1], [0], [0], [1], [0, 0, 1, 1], [], []>} : vector<8x8xf32>, vector<8x32xf32>, vector<8x32xf32> -> vector<8x32xf32>
    %31 = arith.addf %29, %30 : vector<8x32xf32>
    %c0_21 = arith.constant 0 : index
    %c0_22 = arith.constant 0 : index
    %32 = vector.load %arg10[%c0_21, %c0_22] : memref<8x32xf32, #tpu.memory_space<vmem>>, vector<8x32xf32>
    tpu.vector_store %arg10[%c0_21, %c0_22], %31 {strides = array<i32>} : memref<8x32xf32, #tpu.memory_space<vmem>>, vector<8x32xf32>,
    %c0_23 = arith.constant 0 : index
    %c0_24 = arith.constant 0 : index
    %33 = vector.load %arg8[%c0_23, %c0_24] : memref<8x1xf32, #tpu.memory_space<vmem>>, vector<8x1xf32>
    tpu.vector_store %arg8[%c0_23, %c0_24], %15 {strides = array<i32>} : memref<8x1xf32, #tpu.memory_space<vmem>>, vector<8x1xf32>,
    %c0_25 = arith.constant 0 : index
    %c0_26 = arith.constant 0 : index
    %c0_27 = arith.constant 0 : index
    %34 = vector.load %arg7[%c0_25, %c0_26, %c0_27] : memref<1x8x8xf32, #tpu.memory_space<vmem>>, vector<1x8x8xf32>
    %35 = vector.shape_cast %34 : vector<1x8x8xf32> to vector<8x8xf32>
    %36 = vector.shape_cast %20 : vector<8x8xf32> to vector<1x8x8xf32>
    tpu.vector_store %arg7[%c0_25, %c0_26, %c0_27], %36 {strides = array<i32>} : memref<1x8x8xf32, #tpu.memory_space<vmem>>, vector<1x8x8xf32>,
    %c0_i32_28 = arith.constant 0 : i32
    %37 = arith.cmpi eq, %arg2, %c0_i32_28 : i32
    %38 = arith.extui %37 : i1 to i32
    %c0_i32_29 = arith.constant 0 : i32
    %39 = arith.cmpi ne, %38, %c0_i32_29 : i32
    scf.if %39 {
      %c0_30 = arith.constant 0 : index
      %c0_31 = arith.constant 0 : index
      %40 = vector.load %arg9[%c0_30, %c0_31] : memref<8x1xf32, #tpu.memory_space<vmem>>, vector<8x1xf32>
      %41 = tpu.reciprocal %40 {approx = true} : vector<8x1xf32> -> vector<8x1xf32>
      %c0_32 = arith.constant 0 : index
      %c0_33 = arith.constant 0 : index
      %c0_34 = arith.constant 0 : index
      %42 = vector.load %arg7[%c0_32, %c0_33, %c0_34] : memref<1x8x8xf32, #tpu.memory_space<vmem>>, vector<1x8x8xf32>
      %43 = vector.shape_cast %42 : vector<1x8x8xf32> to vector<8x8xf32>
      %44 = vector.broadcast %41 : vector<8x1xf32> to vector<8x8xf32>
      %45 = arith.mulf %43, %44 : vector<8x8xf32>
      %c0_35 = arith.constant 0 : index
      %c0_36 = arith.constant 0 : index
      %c0_37 = arith.constant 0 : index
      %46 = vector.load %arg7[%c0_35, %c0_36, %c0_37] : memref<1x8x8xf32, #tpu.memory_space<vmem>>, vector<1x8x8xf32>
      %47 = vector.shape_cast %46 : vector<1x8x8xf32> to vector<8x8xf32>
      %48 = vector.shape_cast %45 : vector<8x8xf32> to vector<1x8x8xf32>
      tpu.vector_store %arg7[%c0_35, %c0_36, %c0_37], %48 {strides = array<i32>} : memref<1x8x8xf32, #tpu.memory_space<vmem>>, vector<1x8x8xf32>,
      %c0_38 = arith.constant 0 : index
      %c0_39 = arith.constant 0 : index
      %49 = vector.load %arg10[%c0_38, %c0_39] : memref<8x32xf32, #tpu.memory_space<vmem>>, vector<8x32xf32>
      %50 = vector.broadcast %41 : vector<8x1xf32> to vector<8x32xf32>
      %51 = arith.mulf %49, %50 : vector<8x32xf32>
      %c0_40 = arith.constant 0 : index
      %c0_41 = arith.constant 0 : index
      %c0_42 = arith.constant 0 : index
      %52 = vector.load %arg6[%c0_40, %c0_41, %c0_42] : memref<1x8x32xf32, #tpu.memory_space<vmem>>, vector<1x8x32xf32>
      %53 = vector.shape_cast %52 : vector<1x8x32xf32> to vector<8x32xf32>
      %54 = vector.shape_cast %51 : vector<8x32xf32> to vector<1x8x32xf32>
      tpu.vector_store %arg6[%c0_40, %c0_41, %c0_42], %54 {strides = array<i32>} : memref<1x8x32xf32, #tpu.memory_space<vmem>>, vector<1x8x32xf32>,
    } else {
    }
    return
  }
  func.func @transform_0(%arg0: i32, %arg1: i32, %arg2: i32) -> (i32, i32, i32) {
    %c0_i32 = arith.constant 0 : i32
    %c0_i32_0 = arith.constant 0 : i32
    return %arg0, %arg1, %c0_i32 : i32, i32, i32
  }
  func.func @transform_1(%arg0: i32, %arg1: i32, %arg2: i32) -> (i32, i32, i32) {
    %c0_i32 = arith.constant 0 : i32
    %c0_i32_0 = arith.constant 0 : i32
    return %arg0, %arg2, %c0_i32 : i32, i32, i32
  }
  func.func @transform_2(%arg0: i32, %arg1: i32, %arg2: i32) -> (i32, i32, i32) {
    %c0_i32 = arith.constant 0 : i32
    %c0_i32_0 = arith.constant 0 : i32
    return %arg0, %arg2, %c0_i32 : i32, i32, i32
  }
  func.func @transform_3(%arg0: i32, %arg1: i32, %arg2: i32) -> (i32, i32, i32) {
    %c0_i32 = arith.constant 0 : i32
    %c0_i32_0 = arith.constant 0 : i32
    return %arg0, %arg1, %c0_i32 : i32, i32, i32
  }
  func.func @transform_4(%arg0: i32, %arg1: i32, %arg2: i32) -> (i32, i32, i32) {
    %c0_i32 = arith.constant 0 : i32
    %c0_i32_0 = arith.constant 0 : i32
    return %arg0, %arg1, %c0_i32 : i32, i32, i32
  }
}

</mosaic_0001>

<llo_original>
// kernel: tpu_custom_call.1
$region0: #{tpu_custom_call.1}
  #allocation0 [shape = 'u32[]', space=smem, size = 0x4, offset = 0x4, fixed_abs, tag = 'smem constant byte address 0x4 - core index']
  #allocation1 [shape = 'u32[72,128]{1,0:T(1,128)}', space=vmem, size = 0x9000, scoped, tag = 'internal scratch']
  #allocation2 [shape = 'f32[8,1]{1,0:T(8,128)}', space=vmem, size = 0x1000, scoped, tag = 'scratch operand']
  #allocation3 [shape = 'f32[8,1]{1,0:T(8,128)}', space=vmem, size = 0x1000, scoped, tag = 'scratch operand']
  #allocation4 [shape = 'f32[8,32]{1,0:T(8,128)}', space=vmem, size = 0x1000, scoped, tag = 'scratch operand']
  %s0 = inlined_call_operand.hbm [shape: f32[2,8,32], index: 0, kind: input, shape index: {}]
  %s1 = inlined_call_operand.hbm [shape: f32[2,8,32], index: 1, kind: input, shape index: {}]
  %s2 = inlined_call_operand.hbm [shape: f32[2,8,32], index: 2, kind: input, shape index: {}]
  %s3 = inlined_call_operand.hbm [shape: f32[2,8,32], index: 3, kind: output, shape index: {0}]
  %s4 = inlined_call_operand.hbm [shape: f32[2,8,8], index: 4, kind: output, shape index: {1}]
  %5 = xla_tuple %s3, %s4
  %s6 = sld [smem:[#allocation0]]
  $region73: #{tpu_custom_call.1} parent=0
    _
  %s8 = ssub.s32 1, %s6
  %s9 = scalar_select 0, %s8, %s6
  $region1: #{tpu_custom_call.1} parent=0
    #allocation5 [shape = 'u8[8192]{0}', space=vmem, size = 0x2000, scoped, tag = 'input window, operand 0']
    #allocation6 [shape = 's32[2]{0}', space=sflag, size = 0x8, scoped, tag = 'scoped memory for tpu_custom_call.1']
    #allocation7 [shape = 's32[2]{0}', space=sflag, size = 0x8, scoped, tag = 'scoped memory for tpu_custom_call.1']
    #allocation8 [shape = 'u8[8192]{0}', space=vmem, size = 0x2000, scoped, tag = 'input window, operand 1']
    #allocation9 [shape = 's32[2]{0}', space=sflag, size = 0x8, scoped, tag = 'scoped memory for tpu_custom_call.1']
    #allocation10 [shape = 'u8[8192]{0}', space=vmem, size = 0x2000, scoped, tag = 'input window, operand 2']
    #allocation11 [shape = 'u8[8192]{0}', space=vmem, size = 0x2000, scoped, tag = 'output window, operand 0']
    #allocation12 [shape = 'u8[8192]{0}', space=vmem, size = 0x2000, scoped, tag = 'output window, operand 1']
    #allocation13 [shape = 's32[2]{0}', space=sflag, size = 0x8, scoped, tag = 'scoped memory for tpu_custom_call.1']
    %10 = vsyncpa [#allocation6], 0
    %s11 = scalar_lea.sflag [#allocation6], 1
    %12 = vsyncpa %s11, 0
    %13 = vsyncpa [#allocation9], 0
    %s14 = scalar_lea.sflag [#allocation9], 1
    %15 = vsyncpa %s14, 0
    %16 = vsyncpa [#allocation7], 0
    %s17 = scalar_lea.sflag [#allocation7], 1
    %18 = vsyncpa %s17, 0
    %19 = vsyncpa [#allocation13], 0
    %s20 = scalar_lea.sflag [#allocation13], 1
    %21 = vsyncpa %s20, 0
    loop: start=0, step=1, limit=4
    $region2: #{tpu_custom_call.1} parent=1 // loop_pre_header
      _
    $region3: #{tpu_custom_call.1} parent=1 // loop_header
      %s23 = sphi 0, %s27
      %p24 = scmp.ge.s32.totalorder %s23, 4
      %s30 = sphi 0, %s49
      %s31 = sphi 0, %s45
      %s32 = sphi 0, %s41
      %s33 = sphi 0, %s30
      %s34 = sphi 0, %s31
      %s35 = sphi 0, %s32
      %s36 = sphi 0, %s33
      %s37 = sphi 0, %s34
      %s38 = sphi 0, %s35
      %s54 = sphi 0, %s56
      %s57 = sphi 0, %s54
      %s58 = sphi 0, %s57
      %s74 = sphi 0, %s58
      %s82 = sphi 0, %s84
      %s85 = sphi 0, %s82
      %s86 = sphi 0, %s85
      %s102 = sphi 0, %s86
      %s110 = sphi 0, %s112
      %s113 = sphi 0, %s110
      %s114 = sphi 0, %s113
      %s130 = sphi 0, %s114
      %s138 = sphi 0, %s140
      %s141 = sphi 0, %s138
      %s142 = sphi 0, %s141
      %s158 = sphi 0, %s142
      %s166 = sphi 0, %s168
      %s169 = sphi 0, %s166
      %s170 = sphi 0, %s169
      %s186 = sphi 0, %s170
    $region4: #{tpu_custom_call.1} parent=1 // loop_header_branch
      %26 = sbr.rel (%p24) target = $region8
    $region5: #{tpu_custom_call.1} parent=1 // loop_body
      %s28 = ssub.s32 %s23, 1
      %s29 = ssub.s32 %s23, 2
      %s39 = sadd.s32 1, %s32
      %p40 = scmp.ge.s32.totalorder %s39, 1
      %s41 = scalar_select %p40, 0, %s39
      %s42 = sadd.s32 1, %s31
      %s43 = scalar_select %p40, %s42, %s31
      %p44 = scmp.ge.s32.totalorder %s43, 1
      %s45 = scalar_select %p44, 0, %s43
      %s46 = sadd.s32 1, %s30
      %s47 = scalar_select %p44, %s46, %s30
      %p48 = scmp.ge.s32.totalorder %s47, 2
      %s49 = scalar_select %p48, 0, %s47
      %s50 = ssub.s32 %s30, %s49
      %s51 = ssub.s32 %s31, %s45
      %s52 = sor.u32 %s50, %s51
      %p53 = scmp.eq.s32.totalorder %s52, 0
      %s55 = sadd.s32 %s54, 1
      %s56 = scalar_select %p53, %s54, %s55
      %p59 = pneg %p53
      %p60 = scmp.eq.s32.totalorder %s23, 1
      %p61 = por %p59, %p60
      %p62 = scmp.ne.s32.totalorder %s54, %s57
      %p63 = scmp.eq.s32.totalorder %s23, 0
      %p64 = por %p62, %p63
      %p65 = scmp.ne.s32.totalorder %s54, %s57
      %p66 = scmp.eq.s32.totalorder %s28, 1
      %p67 = por %p65, %p66
      %p68 = scmp.ne.s32.totalorder %s57, %s58
      %p69 = scmp.eq.s32.totalorder %s28, 0
      %p70 = por %p68, %p69
      %p71 = scmp.ne.s32.totalorder %s57, %s58
      %p72 = scmp.eq.s32.totalorder %s29, 1
      %p73 = por %p71, %p72
      %p75 = scmp.ne.s32.totalorder %s58, %s74
      %p76 = scmp.eq.s32.totalorder %s29, 0
      %p77 = por %p75, %p76
      %s78 = ssub.s32 %s30, %s49
      %s79 = ssub.s32 %s32, %s41
      %s80 = sor.u32 %s78, %s79
      %p81 = scmp.eq.s32.totalorder %s80, 0
      %s83 = sadd.s32 %s82, 1
      %s84 = scalar_select %p81, %s82, %s83
      %p87 = pneg %p81
      %p88 = scmp.eq.s32.totalorder %s23, 1
      %p89 = por %p87, %p88
      %p90 = scmp.ne.s32.totalorder %s82, %s85
      %p91 = scmp.eq.s32.totalorder %s23, 0
      %p92 = por %p90, %p91
      %p93 = scmp.ne.s32.totalorder %s82, %s85
      %p94 = scmp.eq.s32.totalorder %s28, 1
      %p95 = por %p93, %p94
      %p96 = scmp.ne.s32.totalorder %s85, %s86
      %p97 = scmp.eq.s32.totalorder %s28, 0
      %p98 = por %p96, %p97
      %p99 = scmp.ne.s32.totalorder %s85, %s86
      %p100 = scmp.eq.s32.totalorder %s29, 1
      %p101 = por %p99, %p100
      %p103 = scmp.ne.s32.totalorder %s86, %s102
      %p104 = scmp.eq.s32.totalorder %s29, 0
      %p105 = por %p103, %p104
      %s106 = ssub.s32 %s30, %s49
      %s107 = ssub.s32 %s32, %s41
      %s108 = sor.u32 %s106, %s107
      %p109 = scmp.eq.s32.totalorder %s108, 0
      %s111 = sadd.s32 %s110, 1
      %s112 = scalar_select %p109, %s110, %s111
      %p115 = pneg %p109
      %p116 = scmp.eq.s32.totalorder %s23, 1
      %p117 = por %p115, %p116
      %p118 = scmp.ne.s32.totalorder %s110, %s113
      %p119 = scmp.eq.s32.totalorder %s23, 0
      %p120 = por %p118, %p119
      %p121 = scmp.ne.s32.totalorder %s110, %s113
      %p122 = scmp.eq.s32.totalorder %s28, 1
      %p123 = por %p121, %p122
      %p124 = scmp.ne.s32.totalorder %s113, %s114
      %p125 = scmp.eq.s32.totalorder %s28, 0
      %p126 = por %p124, %p125
      %p127 = scmp.ne.s32.totalorder %s113, %s114
      %p128 = scmp.eq.s32.totalorder %s29, 1
      %p129 = por %p127, %p128
      %p131 = scmp.ne.s32.totalorder %s114, %s130
      %p132 = scmp.eq.s32.totalorder %s29, 0
      %p133 = por %p131, %p132
      %s134 = ssub.s32 %s30, %s49
      %s135 = ssub.s32 %s31, %s45
      %s136 = sor.u32 %s134, %s135
      %p137 = scmp.eq.s32.totalorder %s136, 0
      %s139 = sadd.s32 %s138, 1
      %s140 = scalar_select %p137, %s138, %s139
      %p143 = pneg %p137
      %p144 = scmp.eq.s32.totalorder %s23, 1
      %p145 = por %p143, %p144
      %p146 = scmp.ne.s32.totalorder %s138, %s141
      %p147 = scmp.eq.s32.totalorder %s23, 0
      %p148 = por %p146, %p147
      %p149 = scmp.ne.s32.totalorder %s138, %s141
      %p150 = scmp.eq.s32.totalorder %s28, 1
      %p151 = por %p149, %p150
      %p152 = scmp.ne.s32.totalorder %s141, %s142
      %p153 = scmp.eq.s32.totalorder %s28, 0
      %p154 = por %p152, %p153
      %p155 = scmp.ne.s32.totalorder %s141, %s142
      %p156 = scmp.eq.s32.totalorder %s29, 1
      %p157 = por %p155, %p156
      %p159 = scmp.ne.s32.totalorder %s142, %s158
      %p160 = scmp.eq.s32.totalorder %s29, 0
      %p161 = por %p159, %p160
      %s162 = ssub.s32 %s30, %s49
      %s163 = ssub.s32 %s31, %s45
      %s164 = sor.u32 %s162, %s163
      %p165 = scmp.eq.s32.totalorder %s164, 0
      %s167 = sadd.s32 %s166, 1
      %s168 = scalar_select %p165, %s166, %s167
      %p171 = pneg %p165
      %p172 = scmp.eq.s32.totalorder %s23, 1
      %p173 = por %p171, %p172
      %p174 = scmp.ne.s32.totalorder %s166, %s169
      %p175 = scmp.eq.s32.totalorder %s23, 0
      %p176 = por %p174, %p175
      %p177 = scmp.ne.s32.totalorder %s166, %s169
      %p178 = scmp.eq.s32.totalorder %s28, 1
      %p179 = por %p177, %p178
      %p180 = scmp.ne.s32.totalorder %s169, %s170
      %p181 = scmp.eq.s32.totalorder %s28, 0
      %p182 = por %p180, %p181
      %p183 = scmp.ne.s32.totalorder %s169, %s170
      %p184 = scmp.eq.s32.totalorder %s29, 1
      %p185 = por %p183, %p184
      %p187 = scmp.ne.s32.totalorder %s170, %s186
      %p188 = scmp.eq.s32.totalorder %s29, 0
      %p189 = por %p187, %p188
      %p190 = scmp.le.s32.totalorder 1, %s23
      %p191 = scmp.lt.s32.totalorder %s23, 3
      %p192 = pnand %p190, %p191
      %p193 = pneg %p192
      // Predicated region
      $region9: #{tpu_custom_call.1} parent=5 // pred_check
        _
      $region10: #{tpu_custom_call.1} parent=5 // pred_check_branch
        %195 = sbr.rel (%p192) target = $region12
      $region11: #{tpu_custom_call.1} parent=5 // pred_region
        %s196 = ssub.s32 %s23, 1
      $region12: #{tpu_custom_call.1} parent=5 // pred_fallthru
        _
      %p197 = scmp.lt.s32.totalorder %s23, 2
      // Predicated region
      $region13: #{tpu_custom_call.1} parent=5 // pred_check
        %p198 = pneg %p197
      $region14: #{tpu_custom_call.1} parent=5 // pred_check_branch
        %200 = sbr.rel (%p198) target = $region16
      $region15: #{tpu_custom_call.1} parent=5 // pred_region
        // Predicated region
        $region17: #{tpu_custom_call.1} parent=15 // pred_check
          %p201 = pneg %p64
        $region18: #{tpu_custom_call.1} parent=15 // pred_check_branch
          %203 = sbr.rel (%p201) target = $region20
        $region19: #{tpu_custom_call.1} parent=15 // pred_region
          %s204 = sand.u32 %s54, 1
          %s205 = scalar_lea.sflag [#allocation6], %s204
          %s206 = sand.u32 %s54, 1
          %s207 = smul.addr %s206, 8
          %s208 = scalar_lea.vmem [#allocation5], %s207
          %210 = vsyncadd %s205, 0
          %s211 = sadd.s32 %s31, %s30
          %s212 = smul.addr %s211, 8
          %s213 = scalar_lea.hbm %s0, %s212
          %s215 = sshll.u32 %s213, 4
          %s216 = int_to_ptr.hbm [resolvable:$true] %s215
          %s217 = sshll.u32 %s208, 4
          %s218 = int_to_ptr.vmem [resolvable:$true] %s217
          %220 = dma.hbm_to_vmem [thread:$0]  %s216, 128, %s218, %s205
        $region20: #{tpu_custom_call.1} parent=15 // pred_fallthru
          _
        // Predicated region
        $region21: #{tpu_custom_call.1} parent=15 // pred_check
          %p221 = pneg %p92
        $region22: #{tpu_custom_call.1} parent=15 // pred_check_branch
          %223 = sbr.rel (%p221) target = $region24
        $region23: #{tpu_custom_call.1} parent=15 // pred_region
          %s224 = sand.u32 %s23, 1
          %s225 = scalar_lea.sflag [#allocation9], %s224
          %s226 = sand.u32 %s82, 1
          %s227 = smul.addr %s226, 8
          %s228 = scalar_lea.vmem [#allocation8], %s227
          %230 = vsyncadd %s225, 0
          %s231 = sadd.s32 %s32, %s30
          %s232 = smul.addr %s231, 8
          %s233 = scalar_lea.hbm %s1, %s232
          %s235 = sshll.u32 %s233, 4
          %s236 = int_to_ptr.hbm [resolvable:$true] %s235
          %s237 = sshll.u32 %s228, 4
          %s238 = int_to_ptr.vmem [resolvable:$true] %s237
          %240 = dma.hbm_to_vmem [thread:$0]  %s236, 128, %s238, %s225
        $region24: #{tpu_custom_call.1} parent=15 // pred_fallthru
          _
        // Predicated region
        $region25: #{tpu_custom_call.1} parent=15 // pred_check
          %p241 = pneg %p120
        $region26: #{tpu_custom_call.1} parent=15 // pred_check_branch
          %243 = sbr.rel (%p241) target = $region28
        $region27: #{tpu_custom_call.1} parent=15 // pred_region
          %s244 = sand.u32 %s23, 1
          %s245 = scalar_lea.sflag [#allocation9], %s244
          %s246 = sand.u32 %s110, 1
          %s247 = smul.addr %s246, 8
          %s248 = scalar_lea.vmem [#allocation10], %s247
          %250 = vsyncadd %s245, 0
          %s251 = sadd.s32 %s32, %s30
          %s252 = smul.addr %s251, 8
          %s253 = scalar_lea.hbm %s2, %s252
          %s255 = sshll.u32 %s253, 4
          %s256 = int_to_ptr.hbm [resolvable:$true] %s255
          %s257 = sshll.u32 %s248, 4
          %s258 = int_to_ptr.vmem [resolvable:$true] %s257
          %260 = dma.hbm_to_vmem [thread:$0]  %s256, 128, %s258, %s245
        $region28: #{tpu_custom_call.1} parent=15 // pred_fallthru
          _
      $region16: #{tpu_custom_call.1} parent=5 // pred_fallthru
        _
      %p261 = scmp.le.s32.totalorder 1, %s23
      %p262 = scmp.lt.s32.totalorder %s23, 3
      %p263 = pnand %p261, %p262
      %p264 = pneg %p263
      // Predicated region
      $region29: #{tpu_custom_call.1} parent=5 // pred_check
        _
      $region30: #{tpu_custom_call.1} parent=5 // pred_check_branch
        %266 = sbr.rel (%p263) target = $region32
      $region31: #{tpu_custom_call.1} parent=5 // pred_region
        %s267 = ssub.s32 %s23, 1
        %s268 = sand.u32 %s57, 1
        %s269 = scalar_lea.sflag [#allocation6], %s268
        %s270 = sand.u32 %s57, 1
        %s271 = smul.addr %s270, 8
        %s272 = scalar_lea.vmem [#allocation5], %s271
        // Predicated region
        $region33: #{tpu_custom_call.1} parent=31 // pred_check
          %p273 = pneg %p70
        $region34: #{tpu_custom_call.1} parent=31 // pred_check_branch
          %275 = sbr.rel (%p273) target = $region36
        $region35: #{tpu_custom_call.1} parent=31 // pred_region
          %277 = dma.done %s269, 128
        $region36: #{tpu_custom_call.1} parent=31 // pred_fallthru
          _
        %s278 = sand.u32 %s28, 1
        %s279 = scalar_lea.sflag [#allocation9], %s278
        %s280 = sand.u32 %s85, 1
        %s281 = smul.addr %s280, 8
        %s282 = scalar_lea.vmem [#allocation8], %s281
        // Predicated region
        $region37: #{tpu_custom_call.1} parent=31 // pred_check
          %p283 = pneg %p98
        $region38: #{tpu_custom_call.1} parent=31 // pred_check_branch
          %285 = sbr.rel (%p283) target = $region40
        $region39: #{tpu_custom_call.1} parent=31 // pred_region
          %287 = dma.done %s279, 128
        $region40: #{tpu_custom_call.1} parent=31 // pred_fallthru
          _
        %s288 = sand.u32 %s28, 1
        %s289 = scalar_lea.sflag [#allocation9], %s288
        %s290 = sand.u32 %s113, 1
        %s291 = smul.addr %s290, 8
        %s292 = scalar_lea.vmem [#allocation10], %s291
        // Predicated region
        $region41: #{tpu_custom_call.1} parent=31 // pred_check
          %p293 = pneg %p126
        $region42: #{tpu_custom_call.1} parent=31 // pred_check_branch
          %295 = sbr.rel (%p293) target = $region44
        $region43: #{tpu_custom_call.1} parent=31 // pred_region
          %297 = dma.done %s289, 128
        $region44: #{tpu_custom_call.1} parent=31 // pred_fallthru
          _
        %s298 = sand.u32 %s57, 1
        %s299 = scalar_lea.sflag [#allocation6], %s298
        %s300 = sand.u32 %s57, 1
        %s301 = smul.addr %s300, 8
        %s302 = scalar_lea.vmem [#allocation5], %s301
        %p303 = pneg %p70
        %p304 = pneg %p67
        %s305 = sand.u32 %s28, 1
        %s306 = scalar_lea.sflag [#allocation9], %s305
        %s307 = sand.u32 %s85, 1
        %s308 = smul.addr %s307, 8
        %s309 = scalar_lea.vmem [#allocation8], %s308
        %p310 = pneg %p98
        %p311 = pneg %p95
        %s312 = sand.u32 %s28, 1
        %s313 = scalar_lea.sflag [#allocation9], %s312
        %s314 = sand.u32 %s113, 1
        %s315 = smul.addr %s314, 8
        %s316 = scalar_lea.vmem [#allocation10], %s315
        %p317 = pneg %p126
        %p318 = pneg %p123
        %p319 = pneg %p154
        %p320 = pneg %p151
        %s321 = sand.u32 %s141, 1
        %s322 = scalar_lea.sflag [#allocation7], %s321
        %s323 = sand.u32 %s141, 1
        %s324 = smul.addr %s323, 8
        %s325 = scalar_lea.vmem [#allocation11], %s324
        %p326 = pneg %p182
        %p327 = pneg %p179
        %s328 = sand.u32 %s169, 1
        %s329 = scalar_lea.sflag [#allocation13], %s328
        %s330 = sand.u32 %s169, 1
        %s331 = smul.addr %s330, 8
        %s332 = scalar_lea.vmem [#allocation12], %s331
        %p333 = scmp.eq.s32.totalorder %s35, 0
        // Predicated region
        $region45: #{tpu_custom_call.1} parent=31 // pred_check
          %p334 = pneg %p333
        $region46: #{tpu_custom_call.1} parent=31 // pred_check_branch
          %336 = sbr.rel (%p334) target = $region48
        $region47: #{tpu_custom_call.1} parent=31 // pred_region
          %vm337 = vcmask 7168
          %338 = vst.msk [vmem:[#allocation2] sm:$0xff] %vm337, -1e+30
          %339 = vst.msk [vmem:[#allocation3] sm:$0xff] %vm337, 0.0
          %vm340 = vcmask 261120
          %341 = vst.msk [vmem:[#allocation4] sm:$0xff] %vm340, 0.0
        $region48: #{tpu_custom_call.1} parent=31 // pred_fallthru
          _
        %v342 = vld [vmem:[%s272] sm:$0xff]
        %v343 = vmul.f32 %v342, 0.17677669
        %v344 = vld [vmem:[%s282] sm:$0xff]
        %v345 = vld [vmem:[%s292] sm:$0xff]
        %vm346 = vcmask 261120
        %v348 = vsel %vm346, %v343, 0
        %v351 = vsel %vm346, %v344, 0
        %353 = vmatpush.xpose.msra.mxu0 0.0
        %354 = vmatpush.xpose.msra.mxu0 0.0
        %355 = vmatpush.xpose.msra.mxu0 0.0
        %356 = vmatpush.xpose.msra.mxu0 0.0
        %357 = vmatpush.xpose.msra.mxu0 0.0
        %358 = vmatpush.xpose.msra.mxu0 0.0
        %359 = vmatpush.xpose.msra.mxu0 0.0
        %360 = vmatpush.xpose.msra.mxu0 0.0
        %361 = vmatpush.xpose.msra.mxu0 0.0
        %362 = vmatpush.xpose.msra.mxu0 0.0
        %363 = vmatpush.xpose.msra.mxu0 0.0
        %364 = vmatpush.xpose.msra.mxu0 0.0
        %365 = vmatpush.xpose.msra.mxu0 0.0
        %366 = vmatpush.xpose.msra.mxu0 0.0
        %367 = vmatpush.xpose.msra.mxu0 0.0
        %368 = vmatpush.xpose.msra.mxu0 %v351
        %369 = vmatmul.f32.gmra.mxu0 %v348
        %v370 = vpop.f32.mrf.mxu0
        %v371 = vadd.f32 0.0, %v370
        %372 = vdwg.mxu0
        %v373 = vld [vmem:[#allocation2] sm:$0xff]
        %vm374 = vcmask 64512
        %v375 = vsel %vm374, %v371, -inf
        %376 = vmax.xlane.f32.xlu0 %v375
        %v377 = vpop.xlane.xlu0 %376
        %v378 = vmax.f32 %v373, %v377
        %v379 = vsub.f32 %v373, %v378
        %v380 = vmul.f32 %v379, 1.442695
        %v381 = vpow.pop %v380
        %383 = vset.pattern.permute.xlu0 0
        %384 = vperm.xlu0 %383, %v378
        %v385 = vpop.permute.xlu0 %384
        %v387 = vsub.f32 %v371, %v385
        %v388 = vmul.f32 %v387, 1.442695
        %v389 = vpow.pop %v388
        %v390 = vld [vmem:[#allocation3] sm:$0xff]
        %v391 = vmul.f32 %v381, %v390
        %v392 = vsel %vm374, %v389, 0.0
        %393 = vadd.xlane.f32.xlu0 %v392
        %v394 = vpop.xlane.xlu0 %393
        %v395 = vadd.f32 %v391, %v394
        %vm396 = vcmask 7168
        %397 = vst.msk [vmem:[#allocation3] sm:$0xff] %vm396, %v395
        %v398 = vld [vmem:[#allocation4] sm:$0xff]
        %400 = vset.pattern.permute.xlu0 0
        %401 = vperm.xlu0 %400, %v381
        %v402 = vpop.permute.xlu0 %401
        %v404 = vmul.f32 %v402, %v398
        %v406 = vsel %vm374, %v389, 0
        %408 = vmatpush.msra.mxu0 0.0
        %409 = vmatpush.msra.mxu0 0.0
        %410 = vmatpush.msra.mxu0 0.0
        %411 = vmatpush.msra.mxu0 0.0
        %412 = vmatpush.msra.mxu0 0.0
        %413 = vmatpush.msra.mxu0 0.0
        %414 = vmatpush.msra.mxu0 0.0
        %415 = vmatpush.msra.mxu0 0.0
        %416 = vmatpush.msra.mxu0 0.0
        %417 = vmatpush.msra.mxu0 0.0
        %418 = vmatpush.msra.mxu0 0.0
        %419 = vmatpush.msra.mxu0 0.0
        %420 = vmatpush.msra.mxu0 0.0
        %421 = vmatpush.msra.mxu0 0.0
        %422 = vmatpush.msra.mxu0 0.0
        %423 = vmatpush.msra.mxu0 %v345
        %424 = vmatmul.f32.gmra.mxu0 %v406
        %v425 = vpop.f32.mrf.mxu0
        %v426 = vadd.f32 0.0, %v425
        %427 = vdwg.mxu0
        %v428 = vadd.f32 %v404, %v426
        %429 = vst.msk [vmem:[#allocation4] sm:$0xff] %vm346, %v428
        %430 = vst.msk [vmem:[#allocation2] sm:$0xff] %vm396, %v378
        %431 = vst.msk [vmem:[%s332] sm:$0xff] %vm374, %v389
        // Predicated region
        $region49: #{tpu_custom_call.1} parent=31 // pred_check
          %p432 = pneg %p333
        $region50: #{tpu_custom_call.1} parent=31 // pred_check_branch
          %434 = sbr.rel (%p432) target = $region52
        $region51: #{tpu_custom_call.1} parent=31 // pred_region
          %v435 = vld [vmem:[#allocation3] sm:$0xff]
          %v436 = vrcp.pop %v435
          %v437 = vld [vmem:[%s332] sm:$0xff]
          %439 = vset.pattern.permute.xlu0 0
          %440 = vperm.xlu0 %439, %v436
          %v441 = vpop.permute.xlu0 %440
          %v443 = vmul.f32 %v437, %v441
          %444 = vst.msk [vmem:[%s332] sm:$0xff] %vm374, %v443
          %v445 = vld [vmem:[#allocation4] sm:$0xff]
          %v446 = vmul.f32 %v445, %v441
          %447 = vst.msk [vmem:[%s325] sm:$0xff] %vm346, %v446
        $region52: #{tpu_custom_call.1} parent=31 // pred_fallthru
          _
        %s448 = sand.u32 %s141, 1
        %s449 = scalar_lea.sflag [#allocation7], %s448
        %s450 = sand.u32 %s141, 1
        %s451 = smul.addr %s450, 8
        %s452 = scalar_lea.vmem [#allocation11], %s451
        %s453 = sand.u32 %s169, 1
        %s454 = scalar_lea.sflag [#allocation13], %s453
        %s455 = sand.u32 %s169, 1
        %s456 = smul.addr %s455, 8
        %s457 = scalar_lea.vmem [#allocation12], %s456
        // Predicated region
        $region53: #{tpu_custom_call.1} parent=31 // pred_check
          %p458 = pneg %p151
        $region54: #{tpu_custom_call.1} parent=31 // pred_check_branch
          %460 = sbr.rel (%p458) target = $region56
        $region55: #{tpu_custom_call.1} parent=31 // pred_region
          %462 = vsyncadd %s449, 0
          %s463 = sadd.s32 %s34, %s33
          %s464 = smul.addr %s463, 8
          %s465 = scalar_lea.hbm %s3, %s464
          %s467 = sshll.u32 %s452, 4
          %s468 = int_to_ptr.vmem [resolvable:$true] %s467
          %s469 = sshll.u32 %s465, 4
          %s470 = int_to_ptr.hbm [resolvable:$true] %s469
          %472 = dma.vmem_to_hbm [thread:$0]  %s468, 128, %s470, %s449
        $region56: #{tpu_custom_call.1} parent=31 // pred_fallthru
          _
        // Predicated region
        $region57: #{tpu_custom_call.1} parent=31 // pred_check
          %p473 = pneg %p179
        $region58: #{tpu_custom_call.1} parent=31 // pred_check_branch
          %475 = sbr.rel (%p473) target = $region60
        $region59: #{tpu_custom_call.1} parent=31 // pred_region
          %477 = vsyncadd %s454, 0
          %s478 = sadd.s32 %s34, %s33
          %s479 = smul.addr %s478, 8
          %s480 = scalar_lea.hbm %s4, %s479
          %s482 = sshll.u32 %s457, 4
          %s483 = int_to_ptr.vmem [resolvable:$true] %s482
          %s484 = sshll.u32 %s480, 4
          %s485 = int_to_ptr.hbm [resolvable:$true] %s484
          %487 = dma.vmem_to_hbm [thread:$0]  %s483, 128, %s485, %s454
        $region60: #{tpu_custom_call.1} parent=31 // pred_fallthru
          _
      $region32: #{tpu_custom_call.1} parent=5 // pred_fallthru
        _
      %p488 = scmp.le.s32.totalorder 2, %s23
      // Predicated region
      $region61: #{tpu_custom_call.1} parent=5 // pred_check
        %p489 = pneg %p488
      $region62: #{tpu_custom_call.1} parent=5 // pred_check_branch
        %491 = sbr.rel (%p489) target = $region64
      $region63: #{tpu_custom_call.1} parent=5 // pred_region
        %s492 = ssub.s32 %s23, 2
        // Predicated region
        $region65: #{tpu_custom_call.1} parent=63 // pred_check
          %p493 = pneg %p157
        $region66: #{tpu_custom_call.1} parent=63 // pred_check_branch
          %495 = sbr.rel (%p493) target = $region68
        $region67: #{tpu_custom_call.1} parent=63 // pred_region
          %s496 = sand.u32 %s142, 1
          %s497 = scalar_lea.sflag [#allocation7], %s496
          %s498 = sand.u32 %s142, 1
          %s499 = smul.addr %s498, 8
          %s500 = scalar_lea.vmem [#allocation11], %s499
          %502 = dma.done %s497, 128
        $region68: #{tpu_custom_call.1} parent=63 // pred_fallthru
          _
        // Predicated region
        $region69: #{tpu_custom_call.1} parent=63 // pred_check
          %p503 = pneg %p185
        $region70: #{tpu_custom_call.1} parent=63 // pred_check_branch
          %505 = sbr.rel (%p503) target = $region72
        $region71: #{tpu_custom_call.1} parent=63 // pred_region
          %s506 = sand.u32 %s170, 1
          %s507 = scalar_lea.sflag [#allocation13], %s506
          %s508 = sand.u32 %s170, 1
          %s509 = smul.addr %s508, 8
          %s510 = scalar_lea.vmem [#allocation12], %s509
          %512 = dma.done %s507, 128
        $region72: #{tpu_custom_call.1} parent=63 // pred_fallthru
          _
      $region64: #{tpu_custom_call.1} parent=5 // pred_fallthru
        _
    $region6: #{tpu_custom_call.1} parent=1 // loop_footer
      %s27 = sadd.s32 1, %s23
    $region7: #{tpu_custom_call.1} parent=1 // loop_footer_branch
      %22 = sbr.rel target = $region3
    $region8: #{tpu_custom_call.1} parent=1 // loop_exit
      _
    %513 = vsyncpa [#allocation6], 1
    %s514 = scalar_lea.sflag [#allocation6], 1
    %515 = vsyncpa %s514, 1
    %516 = vsyncpa [#allocation9], 1
    %s517 = scalar_lea.sflag [#allocation9], 1
    %518 = vsyncpa %s517, 1
    %519 = vsyncpa [#allocation7], 1
    %s520 = scalar_lea.sflag [#allocation7], 1
    %521 = vsyncpa %s520, 1
    %522 = vsyncpa [#allocation13], 1
    %s523 = scalar_lea.sflag [#allocation13], 1
    %524 = vsyncpa %s523, 1

</llo_original>
